<compile_context>
chip_gen: v6e
topology: v6e:2x2x1
jax: 0.10.0
libtpu: 0.0.40
codegen_flags: <defaults>
</compile_context>

<pallas_src>
import functools

import jax
import jax.numpy as jnp
from jax.experimental import pallas as pl
from jax.experimental.pallas import tpu as pltpu


def _round_up(x: int, m: int) -> int:
    return ((x + m - 1) // m) * m


def _vmem_capacity_bytes() -> int:
    """Physical VMEM per core; conservative (v7x-sized) fallback if the query fails."""
    try:
        return int(pltpu.get_tpu_info().vmem_capacity_bytes)
    except Exception:
        return 64 * 1024 * 1024


def _gce_kernel(logits_ref, target_ref, loss_ref, *, q, eps, n_total, block_n):
    """One (block_n, C) tile of rows -> per-row GCE loss (padding rows zeroed)."""
    i = pl.program_id(0)

    # NOTE: kept in f32 for portability (v5e has no bf16 VPU/EUP) and to stay HBM-bound.
    x = logits_ref[...].astype(jnp.float32)                      # (block_n, C)
    t = target_ref[...]                                          # (block_n, 1) int32

    # Row-wise numerically-stable softmax pieces; only the target-class entry is needed,
    # so the full row is never normalized.
    m = jnp.max(x, axis=1, keepdims=True)                        # (block_n, 1)
    e = jnp.exp(x - m)                                           # (block_n, C)
    denom = jnp.sum(e, axis=1, keepdims=True)                    # (block_n, 1)

    # One-hot gather of the target-class numerator (no per-row dynamic gather on TPU).
    cls = jax.lax.broadcasted_iota(jnp.int32, x.shape, 1)        # (block_n, C)
    e_t = jnp.sum(jnp.where(cls == t, e, 0.0), axis=1, keepdims=True)  # (block_n, 1)

    # Exact per-row divide on a (block_n, 1) vector: negligible cost, closer parity
    # with the reference than pl.reciprocal(approx=True).
    p_t = e_t / denom + eps                                      # (block_n, 1)

    loss = (1.0 - jnp.power(p_t, q)) / q                         # (block_n, 1)

    # Mask rows past the true batch size (ragged last tile reads unspecified data; the
    # select also kills any NaN/inf produced from that garbage).
    row = jax.lax.broadcasted_iota(jnp.int32, loss.shape, 0) + i * block_n
    loss_ref[...] = jnp.where(row < n_total, loss, 0.0)


def generalized_cross_entropy(logits: jax.Array,
                              target: jax.Array,
                              q: float = 0.7,
                              epsilon: float = 1e-6,
                              block_n: int | None = None) -> jax.Array:
    """GCE loss. logits: (N, C) float, target: (N,) int. Returns scalar float32."""
    n, c = logits.shape

    # Generation-aware tile / VMEM budgets (lane-padded class dim).
    lane_c = _round_up(max(c, 1), 128)
    bytes_per_row = 4 * lane_c
    if _vmem_capacity_bytes() >= 100 * 1024 * 1024:      # v5e / v6e: 128 MiB physical
        tile_budget = 8 * 1024 * 1024
        vmem_limit = 64 * 1024 * 1024
    else:                                                # v7x: 64 MiB physical per TC
        tile_budget = 4 * 1024 * 1024
        vmem_limit = 32 * 1024 * 1024

    # Guard against very large C: the minimum double-buffered logits tile must fit.
    if 2 * 8 * bytes_per_row > vmem_limit - (2 << 20):
        # TODO(synk): C-tiled online-softmax path (carry running max / denom / e_t in
        # three (block_n, 1) scratch vectors) for very-large-vocab cases.
        raise NotImplementedError(
            f"num_classes={c} too large for a single C-wide tile under the "
            f"{vmem_limit >> 20} MiB VMEM budget.")

    if block_n is None:
        block_n = min(4096, max(8, tile_budget // bytes_per_row))
    block_n = min(block_n, _round_up(n, 8))
    block_n = max(8, (block_n // 8) * 8)

    num_tiles = pl.cdiv(n, block_n)
    target2d = target.astype(jnp.int32).reshape(n, 1)

    kernel = functools.partial(_gce_kernel, q=q, eps=epsilon,
                               n_total=n, block_n=block_n)

    per_row = pl.pallas_call(
        kernel,
        out_shape=jax.ShapeDtypeStruct((n, 1), jnp.float32),
        grid_spec=pltpu.PrefetchScalarGridSpec(
            num_scalar_prefetch=0,
            grid=(num_tiles,),
            in_specs=[
                pl.BlockSpec((block_n, c), lambda i: (i, 0)),
                pl.BlockSpec((block_n, 1), lambda i: (i, 0)),
            ],
            out_specs=pl.BlockSpec((block_n, 1), lambda i: (i, 0)),
        ),
        compiler_params=pltpu.CompilerParams(
            dimension_semantics=("parallel",),   # independent tiles: shards across TCs on v7x
            vmem_limit_bytes=vmem_limit,
        ),
    )(logits, target2d)

    # Final reduction over N floats is trivial; done in plain JAX so the grid axis stays
    # carry-free / parallel.
    return jnp.sum(per_row) * (1.0 / n)


def _reference_gce(logits, target, q=0.7, epsilon=1e-6):
    p = jax.nn.softmax(logits.astype(jnp.float32), axis=1)
    p_t = p[jnp.arange(p.shape[0]), target] + epsilon
    return jnp.mean((1.0 - p_t ** q) / q)


if __name__ == "__main__":
    key = jax.random.PRNGKey(0)
    k1, k2, k3, k4 = jax.random.split(key, 4)

    # Case 1: small minibatch, single tile.
    N, C = 8, 32
    logits = jax.random.normal(k1, (N, C), dtype=jnp.float32)
    target = jax.random.randint(k2, (N,), 0, C, dtype=jnp.int32)
    loss = jax.block_until_ready(generalized_cross_entropy(logits, target, q=0.7))
    ref = _reference_gce(logits, target, q=0.7)
    assert jnp.allclose(loss, ref, atol=1e-4, rtol=1e-4), (loss, ref)

    # Case 2: ragged N with multiple tiles (exercises grid, partial last block, mask,
    # parallel per-tile outputs).
    N2, C2 = 37, 96
    logits2 = jax.random.normal(k3, (N2, C2), dtype=jnp.float32)
    target2 = jax.random.randint(k4, (N2,), 0, C2, dtype=jnp.int32)
    loss2 = jax.block_until_ready(
        generalized_cross_entropy(logits2, target2, q=0.7, block_n=16))
    ref2 = _reference_gce(logits2, target2, q=0.7)
    assert jnp.allclose(loss2, ref2, atol=1e-4, rtol=1e-4), (loss2, ref2)

    print("KERNEL_OK")
</pallas_src>

<mosaic_0001>
module attributes {stable_mosaic.version = 11 : i64} {
  func.func @_gce_kernel(%arg0: i32, %arg1: memref<8x32xf32, #tpu.memory_space<vmem>>, %arg2: memref<8x1xi32, #tpu.memory_space<vmem>>, %arg3: memref<8x1xf32, #tpu.memory_space<vmem>>) attributes {dimension_semantics = [#tpu.dimension_semantics<parallel>], iteration_bounds = array<i64: 1>, scalar_prefetch = 0 : i64, scratch_operands = 0 : i64, tpu.core_type = #tpu.core_type<tc>, window_params = [{transform_indices = @transform_0, window_bounds = array<i64: 8, 32>}, {transform_indices = @transform_1, window_bounds = array<i64: 8, 1>}, {transform_indices = @transform_2, window_bounds = array<i64: 8, 1>}]} {
    %c0 = arith.constant 0 : index
    %c0_0 = arith.constant 0 : index
    %0 = vector.load %arg1[%c0, %c0_0] : memref<8x32xf32, #tpu.memory_space<vmem>>, vector<8x32xf32>
    %c0_1 = arith.constant 0 : index
    %c0_2 = arith.constant 0 : index
    %1 = vector.load %arg2[%c0_1, %c0_2] : memref<8x1xi32, #tpu.memory_space<vmem>>, vector<8x1xi32>
    %cst = arith.constant dense<0xFF800000> : vector<8xf32>
    %2 = vector.multi_reduction <maximumf>, %0, %cst [1] : vector<8x32xf32> to vector<8xf32>
    %3 = vector.shape_cast %2 : vector<8xf32> to vector<8x1xf32>
    %4 = vector.broadcast %3 : vector<8x1xf32> to vector<8x32xf32>
    %5 = arith.subf %0, %4 : vector<8x32xf32>
    %6 = math.exp %5 : vector<8x32xf32>
    %cst_3 = arith.constant dense<0.000000e+00> : vector<8xf32>
    %7 = vector.multi_reduction <add>, %6, %cst_3 [1] : vector<8x32xf32> to vector<8xf32>
    %8 = vector.shape_cast %7 : vector<8xf32> to vector<8x1xf32>
    %9 = tpu.iota {dimensions = array<i32: 1>} : vector<8x32xi32>
    %10 = vector.broadcast %1 : vector<8x1xi32> to vector<8x32xi32>
    %11 = arith.cmpi eq, %9, %10 : vector<8x32xi32>
    %cst_4 = arith.constant 0.000000e+00 : f32
    %12 = vector.broadcast %cst_4 : f32 to vector<8x32xf32>
    %13 = arith.select %11, %6, %12 : vector<8x32xi1>, vector<8x32xf32>
    %cst_5 = arith.constant dense<0.000000e+00> : vector<8xf32>
    %14 = vector.multi_reduction <add>, %13, %cst_5 [1] : vector<8x32xf32> to vector<8xf32>
    %15 = vector.shape_cast %14 : vector<8xf32> to vector<8x1xf32>
    %16 = arith.divf %15, %8 : vector<8x1xf32>
    %cst_6 = arith.constant 9.99999997E-7 : f32
    %17 = vector.broadcast %cst_6 : f32 to vector<8x1xf32>
    %18 = arith.addf %16, %17 : vector<8x1xf32>
    %cst_7 = arith.constant 0.699999988 : f32
    %19 = vector.broadcast %cst_7 : f32 to vector<8x1xf32>
    %20 = math.powf %18, %19 : vector<8x1xf32>
    %cst_8 = arith.constant 1.000000e+00 : f32
    %21 = vector.broadcast %cst_8 : f32 to vector<8x1xf32>
    %22 = arith.subf %21, %20 : vector<8x1xf32>
    %cst_9 = arith.constant 0.699999988 : f32
    %23 = vector.broadcast %cst_9 : f32 to vector<8x1xf32>
    %24 = arith.divf %22, %23 : vector<8x1xf32>
    %25 = tpu.iota {dimensions = array<i32: 0>} : vector<8x1xi32>
    %c8_i32 = arith.constant 8 : i32
    %26 = arith.muli %arg0, %c8_i32 : i32
    %27 = vector.broadcast %26 : i32 to vector<8x1xi32>
    %28 = arith.addi %25, %27 : vector<8x1xi32>
    %c8_i32_10 = arith.constant 8 : i32
    %29 = vector.broadcast %c8_i32_10 : i32 to vector<8x1xi32>
    %30 = arith.cmpi slt, %28, %29 : vector<8x1xi32>
    %cst_11 = arith.constant 0.000000e+00 : f32
    %31 = vector.broadcast %cst_11 : f32 to vector<8x1xf32>
    %32 = arith.select %30, %24, %31 : vector<8x1xi1>, vector<8x1xf32>
    %c0_12 = arith.constant 0 : index
    %c0_13 = arith.constant 0 : index
    %33 = vector.load %arg3[%c0_12, %c0_13] : memref<8x1xf32, #tpu.memory_space<vmem>>, vector<8x1xf32>
    tpu.vector_store %arg3[%c0_12, %c0_13], %32 {strides = array<i32>} : memref<8x1xf32, #tpu.memory_space<vmem>>, vector<8x1xf32>,
    return
  }
  func.func @transform_0(%arg0: i32) -> (i32, i32) {
    %c0_i32 = arith.constant 0 : i32
    %c0_i32_0 = arith.constant 0 : i32
    return %arg0, %c0_i32 : i32, i32
  }
  func.func @transform_1(%arg0: i32) -> (i32, i32) {
    %c0_i32 = arith.constant 0 : i32
    %c0_i32_0 = arith.constant 0 : i32
    return %arg0, %c0_i32 : i32, i32
  }
  func.func @transform_2(%arg0: i32) -> (i32, i32) {
    %c0_i32 = arith.constant 0 : i32
    %c0_i32_0 = arith.constant 0 : i32
    return %arg0, %c0_i32 : i32, i32
  }
}

</mosaic_0001>

<llo_original>
// kernel: tpu_custom_call.1
$region0: #{tpu_custom_call.1}
  #allocation0 [shape = 'u32[]', space=smem, size = 0x4, offset = 0x4, fixed_abs, tag = 'smem constant byte address 0x4 - core index']
  #allocation1 [shape = 'u32[144,128]{1,0:T(1,128)}', space=vmem, size = 0x12000, scoped, tag = 'internal scratch']
  %s0 = inlined_call_operand.vmem [shape: f32[8,32], index: 0, kind: input, shape index: {}]
  %s1 = inlined_call_operand.vmem [shape: s32[8,1], index: 1, kind: input, shape index: {}]
  %s2 = inlined_call_operand.vmem [shape: f32[8,1], index: 2, kind: output, shape index: {}]
  %s3 = sld [smem:[#allocation0]]
  $region18: #{tpu_custom_call.1} parent=0
    _
  %s5 = ssub.s32 1, %s3
  %s6 = scalar_select 0, %s5, %s3
  // Predicated region
  $region2: #{tpu_custom_call.1} parent=0 // pred_check
    _
  $region3: #{tpu_custom_call.1} parent=0 // pred_check_branch
    %8 = sbr.rel (0) target = $region5
  $region4: #{tpu_custom_call.1} parent=0 // pred_region
    _
  $region5: #{tpu_custom_call.1} parent=0 // pred_fallthru
    _
  // Predicated region
  $region6: #{tpu_custom_call.1} parent=0 // pred_check
    _
  $region7: #{tpu_custom_call.1} parent=0 // pred_check_branch
    %10 = sbr.rel (0) target = $region9
  $region8: #{tpu_custom_call.1} parent=0 // pred_region
    _
  $region9: #{tpu_custom_call.1} parent=0 // pred_fallthru
    _
  %v11 = vld [vmem:[%s0] sm:$0xff]
  %v12 = vld [vmem:[%s1] sm:$0xff]
  %vm13 = vcmask 261120
  %v14 = vsel %vm13, %v11, -inf
  %15 = vmax.xlane.f32.xlu0 %v14
  %v16 = vpop.xlane.xlu0 %15
  %v17 = vsub.f32 %v11, %v16
  %v18 = vmul.f32 %v17, 1.442695
  %v19 = vpow.pop %v18
  %v20 = vsel %vm13, %v19, 0.0
  %21 = vadd.xlane.f32.xlu0 %v20
  %v22 = vpop.xlane.xlu0 %21
  %v23 = vlaneseq
  %v24 = vand.u32 %v23, 127
  %25 = vset.pattern.permute.xlu0 0
  %26 = vperm.xlu0 %25, %v12
  %v27 = vpop.permute.xlu0 %26
  %vm28 = vcmp.eq.s32.totalorder %v24, %v27
  %v29 = vsel %vm28, %v19, 0.0
  %v30 = vsel %vm13, %v29, 0.0
  %31 = vadd.xlane.f32.xlu0 %v30
  %v32 = vpop.xlane.xlu0 %31
  %v33 = vrcp.pop %v22
  %v34 = vmul.f32 %v32, %v33
  %v35 = vadd.f32 %v34, 1e-06
  %v36 = vpow.f32 %v35, 0.7
  %v37 = vsub.f32 1.0, %v36
  %v38 = vrcp.pop 0.7
  %v39 = vmul.f32 %v37, %v38
  %v40 = vlaneseq
  %v41 = vshrl.u32 %v40, 7
  %s42 = smul.u32 0, 8
  %v43 = vstv %s42
  %v44 = vadd.s32 %v41, %v43
  %vm45 = vcmp.lt.s32.totalorder %v44, 8
  %v46 = vsel %vm45, %v39, 0.0
  %vm47 = vcmask 7168
  %48 = vst.msk [vmem:[%s2] sm:$0xff] %vm47, %v46
  // Predicated region
  $region10: #{tpu_custom_call.1} parent=0 // pred_check
    _
  $region11: #{tpu_custom_call.1} parent=0 // pred_check_branch
    %50 = sbr.rel (0) target = $region13
  $region12: #{tpu_custom_call.1} parent=0 // pred_region
    _
  $region13: #{tpu_custom_call.1} parent=0 // pred_fallthru
    _
  // Predicated region
  $region14: #{tpu_custom_call.1} parent=0 // pred_check
    _
  $region15: #{tpu_custom_call.1} parent=0 // pred_check_branch
    %52 = sbr.rel (0) target = $region17
  $region16: #{tpu_custom_call.1} parent=0 // pred_region
    _
  $region17: #{tpu_custom_call.1} parent=0 // pred_fallthru
    _

</llo_original>
